<compile_context>
chip_gen: v6e
topology: v6e:2x2x1
jax: 0.10.0
libtpu: 0.0.40
codegen_flags: <defaults>
</compile_context>

<pallas_src>
import functools

import jax
import jax.numpy as jnp
from jax.experimental import pallas as pl
from jax.experimental.pallas import tpu as pltpu


def _round_up(x, m):
    return ((x + m - 1) // m) * m


# --------------------------------------------------------------------------
# Pallas kernels
# --------------------------------------------------------------------------
def _diag_forward_kernel(x_ref, s_ref, o_ref):
    # x_ref: (TB, TF) tile, s_ref: (1, TF) tile (constant across batch tiles).
    gate = jax.nn.sigmoid(s_ref[...])                    # exp on EUP slot
    o_ref[...] = (x_ref[...] * gate).astype(o_ref.dtype)  # broadcast over sublanes


def _matmul_forward_kernel(x_ref, s_ref, o_ref, acc_ref):
    # x_ref: (tm, tk) bf16, s_ref: (tk, tn) bf16 -> MXU with f32 accumulation.
    @pl.when(pl.program_id(2) == 0)
    def _():
        acc_ref[...] = jnp.zeros_like(acc_ref)

    acc_ref[...] += jnp.dot(x_ref[...], s_ref[...],
                            preferred_element_type=jnp.float32)

    @pl.when(pl.program_id(2) == pl.num_programs(2) - 1)
    def _():
        o_ref[...] = acc_ref[...].astype(o_ref.dtype)


# --------------------------------------------------------------------------
# Wrappers
# --------------------------------------------------------------------------
@jax.jit
def kernel_prior_forward_diag(pretrained_feat, s):
    """out = pretrained_feat * sigmoid(s); s has shape (F,)."""
    B, F = pretrained_feat.shape
    out_dtype = pretrained_feat.dtype

    # Batch tile (sublane axis): up to 512 rows per step for DMA/compute overlap.
    TB = min(512, _round_up(B, 8))
    B_pad = _round_up(B, TB)
    # Feature tile (lane axis): lane-dense, multiple of 128; cap at 2048 lanes.
    F_pad = _round_up(F, 128)
    TF = F_pad if F_pad <= 2048 else 2048
    F_pad = _round_up(F_pad, TF)

    x_p = jnp.pad(pretrained_feat, ((0, B_pad - B), (0, F_pad - F)))
    s_p = jnp.pad(s.astype(jnp.float32), (0, F_pad - F)).reshape(1, F_pad)

    grid = (B_pad // TB, F_pad // TF)
    out = pl.pallas_call(
        _diag_forward_kernel,
        out_shape=jax.ShapeDtypeStruct((B_pad, F_pad), out_dtype),
        grid=grid,
        in_specs=[
            pl.BlockSpec((TB, TF), lambda i, j: (i, j)),
            # Gate block constant across the batch grid axis -> stays VMEM-resident.
            pl.BlockSpec((1, TF), lambda i, j: (0, j)),
        ],
        out_specs=pl.BlockSpec((TB, TF), lambda i, j: (i, j)),
        compiler_params=pltpu.CompilerParams(
            dimension_semantics=("parallel", "parallel"),
            vmem_limit_bytes=48 * 1024 * 1024,
        ),
    )(x_p, s_p)
    return out[:B, :F]


@functools.partial(jax.jit, static_argnames=("mxu_dtype",))
def kernel_prior_forward_full(pretrained_feat, s, mxu_dtype=jnp.bfloat16):
    """out = pretrained_feat @ s; s has shape (F, F). bf16 MXU, f32 accumulate."""
    B, F = pretrained_feat.shape
    out_dtype = pretrained_feat.dtype

    tm = min(256, _round_up(B, 8))
    B_pad = _round_up(B, tm)
    tn = tk = 256 if F > 128 else 128          # lane-dense multiples of 128
    F_pad = _round_up(F, max(tn, tk))

    # Cast in the wrapper: halves HBM traffic for x and s relative to f32.
    x_p = jnp.pad(pretrained_feat, ((0, B_pad - B), (0, F_pad - F))).astype(mxu_dtype)
    s_p = jnp.pad(s, ((0, F_pad - F), (0, F_pad - F))).astype(mxu_dtype)

    grid = (B_pad // tm, F_pad // tn, F_pad // tk)
    out = pl.pallas_call(
        _matmul_forward_kernel,
        out_shape=jax.ShapeDtypeStruct((B_pad, F_pad), out_dtype),
        grid=grid,
        in_specs=[
            pl.BlockSpec((tm, tk), lambda i, j, k: (i, k)),
            pl.BlockSpec((tk, tn), lambda i, j, k: (k, j)),
        ],
        out_specs=pl.BlockSpec((tm, tn), lambda i, j, k: (i, j)),
        scratch_shapes=[pltpu.VMEM((tm, tn), jnp.float32)],
        compiler_params=pltpu.CompilerParams(
            dimension_semantics=("parallel", "parallel", "arbitrary"),
            vmem_limit_bytes=48 * 1024 * 1024,
        ),
    )(x_p, s_p)
    return out[:B, :F]


def _tensor_product_forward(pretrained_feat, s, feat_dims):
    # TODO(synk): tensor_product path (ragged splits + growing 'bi,bj->bij'
    # outer products) has no clean static Pallas tiling; computed in plain JAX.
    gates = jax.nn.sigmoid(s)
    offs = [0]
    for d in feat_dims:
        offs.append(offs[-1] + d)
    feats = [pretrained_feat[:, offs[i]:offs[i + 1]] * gates[offs[i]:offs[i + 1]]
             for i in range(len(feat_dims))]
    out = feats[0]
    for f in feats[1:]:
        out = jnp.einsum('bi,bj->bij', out, f).reshape(out.shape[0], -1)
    return out


# --------------------------------------------------------------------------
# Module port
# --------------------------------------------------------------------------
_PALLAS_MIN_ELEMS = 16384  # below this, XLA fusion beats a pallas_call launch


class KernelPriorPallas:
    """JAX/Pallas port of KernelPrior.forward (diag, full-matrix, tensor_product)."""

    def __init__(self, num_features, prior_points, feat_dims, prec,
                 learn_scales=False, tensor_product=False,
                 kernel="linear", diag=True, key=None, force_pallas=False):
        self.kernel = kernel
        self.feat_dims = feat_dims
        self.tensor_product = tensor_product
        self.prec = prec
        self.diag = diag
        self.force_pallas = force_pallas
        if diag:
            # nn.Parameter(torch.zeros(num_features))
            self.s = jnp.zeros((num_features,), dtype=jnp.float32)
        else:
            # nn.Parameter(torch.randn(F, F) / F ** 0.5)
            key = key if key is not None else jax.random.PRNGKey(0)
            self.s = (jax.random.normal(key, (num_features, num_features),
                                        dtype=jnp.float32)
                      / num_features ** 0.5)
        n_params = 0 if not learn_scales else self.s.size
        n_constraints = prior_points ** 2 / 2
        print(f"KernelPrior: params / constraints = {n_params / n_constraints:.2g}")

    def forward(self, pretrained_feat):
        if self.tensor_product:
            return _tensor_product_forward(pretrained_feat, self.s, self.feat_dims)
        # Tiny problems: per-call + per-grid-step overhead dwarfs the math.
        if (not self.force_pallas) and pretrained_feat.size < _PALLAS_MIN_ELEMS:
            if self.diag:
                return pretrained_feat * jax.nn.sigmoid(self.s)
            return pretrained_feat @ self.s
        if self.diag:
            return kernel_prior_forward_diag(pretrained_feat, self.s)
        return kernel_prior_forward_full(pretrained_feat, self.s)

    __call__ = forward


# --------------------------------------------------------------------------
# Test
# --------------------------------------------------------------------------
if __name__ == "__main__":
    key = jax.random.PRNGKey(0)
    k_x, k_s = jax.random.split(key)

    # Small but non-aligned shapes: exercise batch tiling (640 -> 2 tiles of 512
    # after padding) and lane padding (200 -> 256).
    B, F = 640, 200
    feat_dims = [100, 100]
    x = jax.random.normal(k_x, (B, F), dtype=jnp.float32)

    # --- diag=True (module default): out = x * sigmoid(s), s init = zeros ---
    prior_diag = KernelPriorPallas(num_features=F, prior_points=B,
                                   feat_dims=feat_dims, prec=1.0, diag=True,
                                   force_pallas=True)
    out_diag = prior_diag(x)
    jax.block_until_ready(out_diag)
    ref_diag = x * jax.nn.sigmoid(prior_diag.s)
    assert out_diag.shape == (B, F) and out_diag.dtype == jnp.float32
    assert jnp.allclose(out_diag, ref_diag, atol=1e-6, rtol=1e-6)

    # --- diag=False: out = x @ s, s init = randn(F,F)/sqrt(F) ---
    prior_full = KernelPriorPallas(num_features=F, prior_points=B,
                                   feat_dims=feat_dims, prec=1.0, diag=False,
                                   key=k_s, force_pallas=True)
    out_full = prior_full(x)
    jax.block_until_ready(out_full)
    ref_full = x @ prior_full.s
    assert out_full.shape == (B, F) and out_full.dtype == jnp.float32
    # bf16 MXU operands with f32 accumulation -> loose tolerance vs f32 ref.
    assert jnp.allclose(out_full, ref_full, atol=5e-2, rtol=5e-2)

    print("KERNEL_OK")
</pallas_src>

<mosaic_0001>
module attributes {stable_mosaic.version = 11 : i64} {
  func.func @_diag_forward_kernel(%arg0: i32, %arg1: i32, %arg2: memref<512x256xf32, #tpu.memory_space<vmem>>, %arg3: memref<1x256xf32, #tpu.memory_space<vmem>>, %arg4: memref<512x256xf32, #tpu.memory_space<vmem>>) attributes {dimension_semantics = [#tpu.dimension_semantics<parallel>, #tpu.dimension_semantics<parallel>], iteration_bounds = array<i64: 2, 1>, scalar_prefetch = 0 : i64, scratch_operands = 0 : i64, tpu.core_type = #tpu.core_type<tc>, window_params = [{transform_indices = @transform_0, window_bounds = array<i64: 512, 256>}, {transform_indices = @transform_1, window_bounds = array<i64: 1, 256>}, {transform_indices = @transform_2, window_bounds = array<i64: 512, 256>}]} {
    %c0 = arith.constant 0 : index
    %c0_0 = arith.constant 0 : index
    %0 = vector.load %arg3[%c0, %c0_0] : memref<1x256xf32, #tpu.memory_space<vmem>>, vector<1x256xf32>
    %1 = arith.negf %0 : vector<1x256xf32>
    %2 = math.exp %1 : vector<1x256xf32>
    %cst = arith.constant 1.000000e+00 : f32
    %3 = vector.broadcast %cst : f32 to vector<1x256xf32>
    %4 = arith.addf %3, %2 : vector<1x256xf32>
    %5 = arith.divf %3, %4 : vector<1x256xf32>
    %c0_1 = arith.constant 0 : index
    %c0_2 = arith.constant 0 : index
    %6 = vector.load %arg2[%c0_1, %c0_2] : memref<512x256xf32, #tpu.memory_space<vmem>>, vector<512x256xf32>
    %7 = vector.broadcast %5 : vector<1x256xf32> to vector<512x256xf32>
    %8 = arith.mulf %6, %7 : vector<512x256xf32>
    %c0_3 = arith.constant 0 : index
    %c0_4 = arith.constant 0 : index
    %9 = vector.load %arg4[%c0_3, %c0_4] : memref<512x256xf32, #tpu.memory_space<vmem>>, vector<512x256xf32>
    tpu.vector_store %arg4[%c0_3, %c0_4], %8 {strides = array<i32>} : memref<512x256xf32, #tpu.memory_space<vmem>>, vector<512x256xf32>,
    return
  }
  func.func @transform_0(%arg0: i32, %arg1: i32) -> (i32, i32) {
    %c0_i32 = arith.constant 0 : i32
    return %arg0, %arg1 : i32, i32
  }
  func.func @transform_1(%arg0: i32, %arg1: i32) -> (i32, i32) {
    %c0_i32 = arith.constant 0 : i32
    %c0_i32_0 = arith.constant 0 : i32
    return %c0_i32, %arg1 : i32, i32
  }
  func.func @transform_2(%arg0: i32, %arg1: i32) -> (i32, i32) {
    %c0_i32 = arith.constant 0 : i32
    return %arg0, %arg1 : i32, i32
  }
}

</mosaic_0001>

<llo_original>
// kernel: kernel_prior_forward_diag.1
$region0: #{kernel_prior_forward_diag.1}
  #allocation0 [shape = 'u32[]', space=smem, size = 0x4, offset = 0x4, fixed_abs, tag = 'smem constant byte address 0x4 - core index']
  #allocation1 [shape = 'u32[144,128]{1,0:T(1,128)}', space=vmem, size = 0x12000, scoped, tag = 'internal scratch']
  %s0 = inlined_call_operand.vmem [shape: f32[1024,256], index: 0, kind: input, shape index: {}]
  %s1 = inlined_call_operand.vmem [shape: f32[1,256], index: 1, kind: input, shape index: {}]
  %s2 = inlined_call_operand.vmem [shape: f32[1024,256], index: 2, kind: output, shape index: {}]
  %s3 = sld [smem:[#allocation0]]
  $region41: #{kernel_prior_forward_diag.1} parent=0
    _
  %s5 = ssub.s32 1, %s3
  %s6 = scalar_select 0, %s5, %s3
  loop: start=0, step=1, limit=4
  $region2: #{kernel_prior_forward_diag.1} parent=0 // loop_pre_header
    _
  $region3: #{kernel_prior_forward_diag.1} parent=0 // loop_header
    %s8 = sphi 0, %s12
    %p9 = scmp.ge.s32.totalorder %s8, 4
    %s15 = sphi 0, %s27
    %s16 = sphi 0, %s23
    %s17 = sphi 0, %s15
    %s18 = sphi 0, %s16
    %s19 = sphi 0, %s17
    %s20 = sphi 0, %s18
    %s32 = sphi 0, %s34
    %s35 = sphi 0, %s32
    %s36 = sphi 0, %s35
    %s52 = sphi 0, %s36
    %s58 = sphi 0, %s60
    %s61 = sphi 0, %s58
    %s62 = sphi 0, %s61
    %s78 = sphi 0, %s62
    %s86 = sphi 0, %s88
    %s89 = sphi 0, %s86
    %s90 = sphi 0, %s89
    %s106 = sphi 0, %s90
  $region4: #{kernel_prior_forward_diag.1} parent=0 // loop_header_branch
    %11 = sbr.rel (%p9) target = $region8
  $region5: #{kernel_prior_forward_diag.1} parent=0 // loop_body
    %s13 = ssub.s32 %s8, 1
    %s14 = ssub.s32 %s8, 2
    %s21 = sadd.s32 1, %s16
    %p22 = scmp.ge.s32.totalorder %s21, 1
    %s23 = scalar_select %p22, 0, %s21
    %s24 = sadd.s32 1, %s15
    %s25 = scalar_select %p22, %s24, %s15
    %p26 = scmp.ge.s32.totalorder %s25, 2
    %s27 = scalar_select %p26, 0, %s25
    %s28 = ssub.s32 %s15, %s27
    %s29 = ssub.s32 %s16, %s23
    %s30 = sor.u32 %s28, %s29
    %p31 = scmp.eq.s32.totalorder %s30, 0
    %s33 = sadd.s32 %s32, 1
    %s34 = scalar_select %p31, %s32, %s33
    %p37 = pneg %p31
    %p38 = scmp.eq.s32.totalorder %s8, 1
    %p39 = por %p37, %p38
    %p40 = scmp.ne.s32.totalorder %s32, %s35
    %p41 = scmp.eq.s32.totalorder %s8, 0
    %p42 = por %p40, %p41
    %p43 = scmp.ne.s32.totalorder %s32, %s35
    %p44 = scmp.eq.s32.totalorder %s13, 1
    %p45 = por %p43, %p44
    %p46 = scmp.ne.s32.totalorder %s35, %s36
    %p47 = scmp.eq.s32.totalorder %s13, 0
    %p48 = por %p46, %p47
    %p49 = scmp.ne.s32.totalorder %s35, %s36
    %p50 = scmp.eq.s32.totalorder %s14, 1
    %p51 = por %p49, %p50
    %p53 = scmp.ne.s32.totalorder %s36, %s52
    %p54 = scmp.eq.s32.totalorder %s14, 0
    %p55 = por %p53, %p54
    %s56 = ssub.s32 %s16, %s23
    %p57 = scmp.eq.s32.totalorder %s56, 0
    %s59 = sadd.s32 %s58, 1
    %s60 = scalar_select %p57, %s58, %s59
    %p63 = pneg %p57
    %p64 = scmp.eq.s32.totalorder %s8, 1
    %p65 = por %p63, %p64
    %p66 = scmp.ne.s32.totalorder %s58, %s61
    %p67 = scmp.eq.s32.totalorder %s8, 0
    %p68 = por %p66, %p67
    %p69 = scmp.ne.s32.totalorder %s58, %s61
    %p70 = scmp.eq.s32.totalorder %s13, 1
    %p71 = por %p69, %p70
    %p72 = scmp.ne.s32.totalorder %s61, %s62
    %p73 = scmp.eq.s32.totalorder %s13, 0
    %p74 = por %p72, %p73
    %p75 = scmp.ne.s32.totalorder %s61, %s62
    %p76 = scmp.eq.s32.totalorder %s14, 1
    %p77 = por %p75, %p76
    %p79 = scmp.ne.s32.totalorder %s62, %s78
    %p80 = scmp.eq.s32.totalorder %s14, 0
    %p81 = por %p79, %p80
    %s82 = ssub.s32 %s15, %s27
    %s83 = ssub.s32 %s16, %s23
    %s84 = sor.u32 %s82, %s83
    %p85 = scmp.eq.s32.totalorder %s84, 0
    %s87 = sadd.s32 %s86, 1
    %s88 = scalar_select %p85, %s86, %s87
    %p91 = pneg %p85
    %p92 = scmp.eq.s32.totalorder %s8, 1
    %p93 = por %p91, %p92
    %p94 = scmp.ne.s32.totalorder %s86, %s89
    %p95 = scmp.eq.s32.totalorder %s8, 0
    %p96 = por %p94, %p95
    %p97 = scmp.ne.s32.totalorder %s86, %s89
    %p98 = scmp.eq.s32.totalorder %s13, 1
    %p99 = por %p97, %p98
    %p100 = scmp.ne.s32.totalorder %s89, %s90
    %p101 = scmp.eq.s32.totalorder %s13, 0
    %p102 = por %p100, %p101
    %p103 = scmp.ne.s32.totalorder %s89, %s90
    %p104 = scmp.eq.s32.totalorder %s14, 1
    %p105 = por %p103, %p104
    %p107 = scmp.ne.s32.totalorder %s90, %s106
    %p108 = scmp.eq.s32.totalorder %s14, 0
    %p109 = por %p107, %p108
    %p110 = scmp.le.s32.totalorder 1, %s8
    %p111 = scmp.lt.s32.totalorder %s8, 3
    %p112 = pnand %p110, %p111
    %p113 = pneg %p112
    // Predicated region
    $region9: #{kernel_prior_forward_diag.1} parent=5 // pred_check
      _
    $region10: #{kernel_prior_forward_diag.1} parent=5 // pred_check_branch
      %115 = sbr.rel (%p112) target = $region12
    $region11: #{kernel_prior_forward_diag.1} parent=5 // pred_region
      %s116 = ssub.s32 %s8, 1
      // Predicated region
      $region13: #{kernel_prior_forward_diag.1} parent=11 // pred_check
        %p117 = pneg %p74
      $region14: #{kernel_prior_forward_diag.1} parent=11 // pred_check_branch
        %119 = sbr.rel (%p117) target = $region16
      $region15: #{kernel_prior_forward_diag.1} parent=11 // pred_region
        %s120 = smul.u32 2, %s18
        %p121 = scmp.lt.s32.totalorder %s120, 1
        %s122 = scalar_select %p121, %s120, 1
        %s123 = scalar_lea.vmem %s1, %s122
        %s124 = smul.u32 2, %s18
      $region16: #{kernel_prior_forward_diag.1} parent=11 // pred_fallthru
        _
    $region12: #{kernel_prior_forward_diag.1} parent=5 // pred_fallthru
      _
    %p125 = scmp.lt.s32.totalorder %s8, 2
    // Predicated region
    $region17: #{kernel_prior_forward_diag.1} parent=5 // pred_check
      %p126 = pneg %p125
    $region18: #{kernel_prior_forward_diag.1} parent=5 // pred_check_branch
      %128 = sbr.rel (%p126) target = $region20
    $region19: #{kernel_prior_forward_diag.1} parent=5 // pred_region
      // Predicated region
      $region21: #{kernel_prior_forward_diag.1} parent=19 // pred_check
        %p129 = pneg %p42
      $region22: #{kernel_prior_forward_diag.1} parent=19 // pred_check_branch
        %131 = sbr.rel (%p129) target = $region24
      $region23: #{kernel_prior_forward_diag.1} parent=19 // pred_region
        %s132 = smul.u32 64, %s15
        %s133 = smul.u32 2, %s16
        %p134 = scmp.lt.s32.totalorder %s132, 127
        %s135 = scalar_select %p134, %s132, 127
        %p136 = scmp.lt.s32.totalorder %s133, 1
        %s137 = scalar_select %p136, %s133, 1
        %s138 = smul.addr %s135, 2
        %s139 = sadd.s32 %s137, %s138
        %s140 = smul.addr %s139, 8
        %s141 = scalar_lea.vmem %s0, %s140
        %s142 = smul.u32 64, %s15
        %s143 = smul.u32 2, %s16
      $region24: #{kernel_prior_forward_diag.1} parent=19 // pred_fallthru
        _
    $region20: #{kernel_prior_forward_diag.1} parent=5 // pred_fallthru
      _
    %p144 = scmp.le.s32.totalorder 1, %s8
    %p145 = scmp.lt.s32.totalorder %s8, 3
    %p146 = pnand %p144, %p145
    %p147 = pneg %p146
    // Predicated region
    $region25: #{kernel_prior_forward_diag.1} parent=5 // pred_check
      _
    $region26: #{kernel_prior_forward_diag.1} parent=5 // pred_check_branch
      %149 = sbr.rel (%p146) target = $region28
    $region27: #{kernel_prior_forward_diag.1} parent=5 // pred_region
      %s150 = ssub.s32 %s8, 1
      %s151 = smul.u32 64, %s17
      %s152 = smul.u32 2, %s18
      %p153 = scmp.lt.s32.totalorder %s151, 127
      %s154 = scalar_select %p153, %s151, 127
      %p155 = scmp.lt.s32.totalorder %s152, 1
      %s156 = scalar_select %p155, %s152, 1
      %s157 = smul.addr %s154, 2
      %s158 = sadd.s32 %s156, %s157
      %s159 = smul.addr %s158, 8
      %s160 = scalar_lea.vmem %s0, %s159
      %p161 = pneg %p48
      %p162 = pneg %p45
      %s163 = smul.u32 2, %s18
      %p164 = scmp.lt.s32.totalorder %s163, 1
      %s165 = scalar_select %p164, %s163, 1
      %s166 = scalar_lea.vmem %s1, %s165
      %p167 = pneg %p74
      %p168 = pneg %p71
      %p169 = pneg %p102
      %p170 = pneg %p99
      %s171 = smul.u32 64, %s17
      %s172 = smul.u32 2, %s18
      %p173 = scmp.lt.s32.totalorder %s171, 127
      %s174 = scalar_select %p173, %s171, 127
      %p175 = scmp.lt.s32.totalorder %s172, 1
      %s176 = scalar_select %p175, %s172, 1
      %s177 = smul.addr %s174, 2
      %s178 = sadd.s32 %s176, %s177
      %s179 = smul.addr %s178, 8
      %s180 = scalar_lea.vmem %s2, %s179
      %s181 = smul.u32 64, %s17
      %s182 = smul.u32 2, %s18
      %p183 = scmp.lt.s32.totalorder %s181, 127
      %s184 = scalar_select %p183, %s181, 127
      %p185 = scmp.lt.s32.totalorder %s182, 1
      %s186 = scalar_select %p185, %s182, 1
      %s187 = smul.addr %s184, 2
      %s188 = sadd.s32 %s186, %s187
      %s189 = smul.addr %s188, 8
      %s190 = scalar_lea.vmem %s0, %s189
      %s191 = smul.u32 64, %s17
      %s192 = smul.u32 2, %s18
      %s193 = smul.u32 2, %s18
      %p194 = scmp.lt.s32.totalorder %s193, 1
      %s195 = scalar_select %p194, %s193, 1
      %s196 = scalar_lea.vmem %s1, %s195
      %s197 = smul.u32 2, %s18
      %s198 = smul.u32 64, %s17
      %s199 = smul.u32 2, %s18
      %p200 = scmp.lt.s32.totalorder %s198, 127
      %s201 = scalar_select %p200, %s198, 127
      %p202 = scmp.lt.s32.totalorder %s199, 1
      %s203 = scalar_select %p202, %s199, 1
      %s204 = smul.addr %s201, 2
      %s205 = sadd.s32 %s203, %s204
      %s206 = smul.addr %s205, 8
      %s207 = scalar_lea.vmem %s2, %s206
      %s208 = smul.u32 64, %s17
      %s209 = smul.u32 2, %s18
      %v210 = vld [vmem:[%s196] sm:$0x3]
      %v211 = vxor.u32 %v210, 2147483648
      %v212 = vmul.f32 %v211, 1.442695
      %v213 = vpow.pop %v212
      %v214 = vadd.f32 %v213, 1.0
      %v215 = vrcp.pop %v214
      %v216 = vmul.f32 1.0, %v215
      %v217 = vld [vmem:[%s190] sm:$0xff]
      %v218 = vld [vmem:[%s190 + $0x8] sm:$0xff]
      %v219 = vld [vmem:[%s190 + $0x10] sm:$0xff]
      %v220 = vld [vmem:[%s190 + $0x18] sm:$0xff]
      %v221 = vld [vmem:[%s190 + $0x20] sm:$0xff]
      %v222 = vld [vmem:[%s190 + $0x28] sm:$0xff]
      %v223 = vld [vmem:[%s190 + $0x30] sm:$0xff]
      %v224 = vld [vmem:[%s190 + $0x38] sm:$0xff]
      %v225 = vld [vmem:[%s190 + $0x40] sm:$0xff]
      %v226 = vld [vmem:[%s190 + $0x48] sm:$0xff]
      %v227 = vld [vmem:[%s190 + $0x50] sm:$0xff]
      %v228 = vld [vmem:[%s190 + $0x58] sm:$0xff]
      %v229 = vld [vmem:[%s190 + $0x60] sm:$0xff]
      %v230 = vld [vmem:[%s190 + $0x68] sm:$0xff]
      %v231 = vld [vmem:[%s190 + $0x70] sm:$0xff]
      %v232 = vld [vmem:[%s190 + $0x78] sm:$0xff]
      %v233 = vld [vmem:[%s190 + $0x80] sm:$0xff]
      %v234 = vld [vmem:[%s190 + $0x88] sm:$0xff]
      %v235 = vld [vmem:[%s190 + $0x90] sm:$0xff]
      %v236 = vld [vmem:[%s190 + $0x98] sm:$0xff]
      %v237 = vld [vmem:[%s190 + $0xa0] sm:$0xff]
      %v238 = vld [vmem:[%s190 + $0xa8] sm:$0xff]
      %v239 = vld [vmem:[%s190 + $0xb0] sm:$0xff]
      %v240 = vld [vmem:[%s190 + $0xb8] sm:$0xff]
      %v241 = vld [vmem:[%s190 + $0xc0] sm:$0xff]
      %v242 = vld [vmem:[%s190 + $0xc8] sm:$0xff]
      %v243 = vld [vmem:[%s190 + $0xd0] sm:$0xff]
      %v244 = vld [vmem:[%s190 + $0xd8] sm:$0xff]
      %v245 = vld [vmem:[%s190 + $0xe0] sm:$0xff]
      %v246 = vld [vmem:[%s190 + $0xe8] sm:$0xff]
      %v247 = vld [vmem:[%s190 + $0xf0] sm:$0xff]
      %v248 = vld [vmem:[%s190 + $0xf8] sm:$0xff]
      %v249 = vld [vmem:[%s190 + $0x100] sm:$0xff]
      %v250 = vld [vmem:[%s190 + $0x108] sm:$0xff]
      %v251 = vld [vmem:[%s190 + $0x110] sm:$0xff]
      %v252 = vld [vmem:[%s190 + $0x118] sm:$0xff]
      %v253 = vld [vmem:[%s190 + $0x120] sm:$0xff]
      %v254 = vld [vmem:[%s190 + $0x128] sm:$0xff]
      %v255 = vld [vmem:[%s190 + $0x130] sm:$0xff]
      %v256 = vld [vmem:[%s190 + $0x138] sm:$0xff]
      %v257 = vld [vmem:[%s190 + $0x140] sm:$0xff]
      %v258 = vld [vmem:[%s190 + $0x148] sm:$0xff]
      %v259 = vld [vmem:[%s190 + $0x150] sm:$0xff]
      %v260 = vld [vmem:[%s190 + $0x158] sm:$0xff]
      %v261 = vld [vmem:[%s190 + $0x160] sm:$0xff]
      %v262 = vld [vmem:[%s190 + $0x168] sm:$0xff]
      %v263 = vld [vmem:[%s190 + $0x170] sm:$0xff]
      %v264 = vld [vmem:[%s190 + $0x178] sm:$0xff]
      %v265 = vld [vmem:[%s190 + $0x180] sm:$0xff]
      %v266 = vld [vmem:[%s190 + $0x188] sm:$0xff]
      %v267 = vld [vmem:[%s190 + $0x190] sm:$0xff]
      %v268 = vld [vmem:[%s190 + $0x198] sm:$0xff]
      %v269 = vld [vmem:[%s190 + $0x1a0] sm:$0xff]
      %v270 = vld [vmem:[%s190 + $0x1a8] sm:$0xff]
      %v271 = vld [vmem:[%s190 + $0x1b0] sm:$0xff]
      %v272 = vld [vmem:[%s190 + $0x1b8] sm:$0xff]
      %v273 = vld [vmem:[%s190 + $0x1c0] sm:$0xff]
      %v274 = vld [vmem:[%s190 + $0x1c8] sm:$0xff]
      %v275 = vld [vmem:[%s190 + $0x1d0] sm:$0xff]
      %v276 = vld [vmem:[%s190 + $0x1d8] sm:$0xff]
      %v277 = vld [vmem:[%s190 + $0x1e0] sm:$0xff]
      %v278 = vld [vmem:[%s190 + $0x1e8] sm:$0xff]
      %v279 = vld [vmem:[%s190 + $0x1f0] sm:$0xff]
      %v280 = vld [vmem:[%s190 + $0x1f8] sm:$0xff]
      %v281 = vld [vmem:[%s190 + $0x200] sm:$0xff]
      %v282 = vld [vmem:[%s190 + $0x208] sm:$0xff]
      %v283 = vld [vmem:[%s190 + $0x210] sm:$0xff]
      %v284 = vld [vmem:[%s190 + $0x218] sm:$0xff]
      %v285 = vld [vmem:[%s190 + $0x220] sm:$0xff]
      %v286 = vld [vmem:[%s190 + $0x228] sm:$0xff]
      %v287 = vld [vmem:[%s190 + $0x230] sm:$0xff]
      %v288 = vld [vmem:[%s190 + $0x238] sm:$0xff]
      %v289 = vld [vmem:[%s190 + $0x240] sm:$0xff]
      %v290 = vld [vmem:[%s190 + $0x248] sm:$0xff]
      %v291 = vld [vmem:[%s190 + $0x250] sm:$0xff]
      %v292 = vld [vmem:[%s190 + $0x258] sm:$0xff]
      %v293 = vld [vmem:[%s190 + $0x260] sm:$0xff]
      %v294 = vld [vmem:[%s190 + $0x268] sm:$0xff]
      %v295 = vld [vmem:[%s190 + $0x270] sm:$0xff]
      %v296 = vld [vmem:[%s190 + $0x278] sm:$0xff]
      %v297 = vld [vmem:[%s190 + $0x280] sm:$0xff]
      %v298 = vld [vmem:[%s190 + $0x288] sm:$0xff]
      %v299 = vld [vmem:[%s190 + $0x290] sm:$0xff]
      %v300 = vld [vmem:[%s190 + $0x298] sm:$0xff]
      %v301 = vld [vmem:[%s190 + $0x2a0] sm:$0xff]
      %v302 = vld [vmem:[%s190 + $0x2a8] sm:$0xff]
      %v303 = vld [vmem:[%s190 + $0x2b0] sm:$0xff]
      %v304 = vld [vmem:[%s190 + $0x2b8] sm:$0xff]
      %v305 = vld [vmem:[%s190 + $0x2c0] sm:$0xff]
      %v306 = vld [vmem:[%s190 + $0x2c8] sm:$0xff]
      %v307 = vld [vmem:[%s190 + $0x2d0] sm:$0xff]
      %v308 = vld [vmem:[%s190 + $0x2d8] sm:$0xff]
      %v309 = vld [vmem:[%s190 + $0x2e0] sm:$0xff]
      %v310 = vld [vmem:[%s190 + $0x2e8] sm:$0xff]
      %v311 = vld [vmem:[%s190 + $0x2f0] sm:$0xff]
      %v312 = vld [vmem:[%s190 + $0x2f8] sm:$0xff]
      %v313 = vld [vmem:[%s190 + $0x300] sm:$0xff]
      %v314 = vld [vmem:[%s190 + $0x308] sm:$0xff]
      %v315 = vld [vmem:[%s190 + $0x310] sm:$0xff]
      %v316 = vld [vmem:[%s190 + $0x318] sm:$0xff]
      %v317 = vld [vmem:[%s190 + $0x320] sm:$0xff]
      %v318 = vld [vmem:[%s190 + $0x328] sm:$0xff]
      %v319 = vld [vmem:[%s190 + $0x330] sm:$0xff]
      %v320 = vld [vmem:[%s190 + $0x338] sm:$0xff]
      %v321 = vld [vmem:[%s190 + $0x340] sm:$0xff]
      %v322 = vld [vmem:[%s190 + $0x348] sm:$0xff]
      %v323 = vld [vmem:[%s190 + $0x350] sm:$0xff]
      %v324 = vld [vmem:[%s190 + $0x358] sm:$0xff]
      %v325 = vld [vmem:[%s190 + $0x360] sm:$0xff]
      %v326 = vld [vmem:[%s190 + $0x368] sm:$0xff]
      %v327 = vld [vmem:[%s190 + $0x370] sm:$0xff]
      %v328 = vld [vmem:[%s190 + $0x378] sm:$0xff]
      %v329 = vld [vmem:[%s190 + $0x380] sm:$0xff]
      %v330 = vld [vmem:[%s190 + $0x388] sm:$0xff]
      %v331 = vld [vmem:[%s190 + $0x390] sm:$0xff]
      %v332 = vld [vmem:[%s190 + $0x398] sm:$0xff]
      %v333 = vld [vmem:[%s190 + $0x3a0] sm:$0xff]
      %v334 = vld [vmem:[%s190 + $0x3a8] sm:$0xff]
      %v335 = vld [vmem:[%s190 + $0x3b0] sm:$0xff]
      %v336 = vld [vmem:[%s190 + $0x3b8] sm:$0xff]
      %v337 = vld [vmem:[%s190 + $0x3c0] sm:$0xff]
      %v338 = vld [vmem:[%s190 + $0x3c8] sm:$0xff]
      %v339 = vld [vmem:[%s190 + $0x3d0] sm:$0xff]
      %v340 = vld [vmem:[%s190 + $0x3d8] sm:$0xff]
      %v341 = vld [vmem:[%s190 + $0x3e0] sm:$0xff]
      %v342 = vld [vmem:[%s190 + $0x3e8] sm:$0xff]
      %v343 = vld [vmem:[%s190 + $0x3f0] sm:$0xff]
      %v344 = vld [vmem:[%s190 + $0x3f8] sm:$0xff]
      %v346 = vlaneseq
      %v347 = vshrl.u32 %v346, 7
      %v348 = vsub.s32 0, %v347
      %v349 = vrot.slane %v216, %v348
      %v350 = vlaneseq
      %v351 = vshrl.u32 %v350, 7
      %v352 = vsub.s32 1, %v351
      %v353 = vrot.slane %v216, %v352
      %v356 = vmul.f32 %v217, %v349
      %v357 = vmul.f32 %v218, %v353
      %v358 = vmul.f32 %v219, %v349
      %v359 = vmul.f32 %v220, %v353
      %v360 = vmul.f32 %v221, %v349
      %v361 = vmul.f32 %v222, %v353
      %v362 = vmul.f32 %v223, %v349
      %v363 = vmul.f32 %v224, %v353
      %v364 = vmul.f32 %v225, %v349
      %v365 = vmul.f32 %v226, %v353
      %v366 = vmul.f32 %v227, %v349
      %v367 = vmul.f32 %v228, %v353
      %v368 = vmul.f32 %v229, %v349
      %v369 = vmul.f32 %v230, %v353
      %v370 = vmul.f32 %v231, %v349
      %v371 = vmul.f32 %v232, %v353
      %v372 = vmul.f32 %v233, %v349
      %v373 = vmul.f32 %v234, %v353
      %v374 = vmul.f32 %v235, %v349
      %v375 = vmul.f32 %v236, %v353
      %v376 = vmul.f32 %v237, %v349
      %v377 = vmul.f32 %v238, %v353
      %v378 = vmul.f32 %v239, %v349
      %v379 = vmul.f32 %v240, %v353
      %v380 = vmul.f32 %v241, %v349
      %v381 = vmul.f32 %v242, %v353
      %v382 = vmul.f32 %v243, %v349
      %v383 = vmul.f32 %v244, %v353
      %v384 = vmul.f32 %v245, %v349
      %v385 = vmul.f32 %v246, %v353
      %v386 = vmul.f32 %v247, %v349
      %v387 = vmul.f32 %v248, %v353
      %v388 = vmul.f32 %v249, %v349
      %v389 = vmul.f32 %v250, %v353
      %v390 = vmul.f32 %v251, %v349
      %v391 = vmul.f32 %v252, %v353
      %v392 = vmul.f32 %v253, %v349
      %v393 = vmul.f32 %v254, %v353
      %v394 = vmul.f32 %v255, %v349
      %v395 = vmul.f32 %v256, %v353
      %v396 = vmul.f32 %v257, %v349
      %v397 = vmul.f32 %v258, %v353
      %v398 = vmul.f32 %v259, %v349
      %v399 = vmul.f32 %v260, %v353
      %v400 = vmul.f32 %v261, %v349
      %v401 = vmul.f32 %v262, %v353
      %v402 = vmul.f32 %v263, %v349
      %v403 = vmul.f32 %v264, %v353
      %v404 = vmul.f32 %v265, %v349
      %v405 = vmul.f32 %v266, %v353
      %v406 = vmul.f32 %v267, %v349
      %v407 = vmul.f32 %v268, %v353
      %v408 = vmul.f32 %v269, %v349
      %v409 = vmul.f32 %v270, %v353
      %v410 = vmul.f32 %v271, %v349
      %v411 = vmul.f32 %v272, %v353
      %v412 = vmul.f32 %v273, %v349
      %v413 = vmul.f32 %v274, %v353
      %v414 = vmul.f32 %v275, %v349
      %v415 = vmul.f32 %v276, %v353
      %v416 = vmul.f32 %v277, %v349
      %v417 = vmul.f32 %v278, %v353
      %v418 = vmul.f32 %v279, %v349
      %v419 = vmul.f32 %v280, %v353
      %v420 = vmul.f32 %v281, %v349
      %v421 = vmul.f32 %v282, %v353
      %v422 = vmul.f32 %v283, %v349
      %v423 = vmul.f32 %v284, %v353
      %v424 = vmul.f32 %v285, %v349
      %v425 = vmul.f32 %v286, %v353
      %v426 = vmul.f32 %v287, %v349
      %v427 = vmul.f32 %v288, %v353
      %v428 = vmul.f32 %v289, %v349
      %v429 = vmul.f32 %v290, %v353
      %v430 = vmul.f32 %v291, %v349
      %v431 = vmul.f32 %v292, %v353
      %v432 = vmul.f32 %v293, %v349
      %v433 = vmul.f32 %v294, %v353
      %v434 = vmul.f32 %v295, %v349
      %v435 = vmul.f32 %v296, %v353
      %v436 = vmul.f32 %v297, %v349
      %v437 = vmul.f32 %v298, %v353
      %v438 = vmul.f32 %v299, %v349
      %v439 = vmul.f32 %v300, %v353
      %v440 = vmul.f32 %v301, %v349
      %v441 = vmul.f32 %v302, %v353
      %v442 = vmul.f32 %v303, %v349
      %v443 = vmul.f32 %v304, %v353
      %v444 = vmul.f32 %v305, %v349
      %v445 = vmul.f32 %v306, %v353
      %v446 = vmul.f32 %v307, %v349
      %v447 = vmul.f32 %v308, %v353
      %v448 = vmul.f32 %v309, %v349
      %v449 = vmul.f32 %v310, %v353
      %v450 = vmul.f32 %v311, %v349
      %v451 = vmul.f32 %v312, %v353
      %v452 = vmul.f32 %v313, %v349
      %v453 = vmul.f32 %v314, %v353
      %v454 = vmul.f32 %v315, %v349
      %v455 = vmul.f32 %v316, %v353
      %v456 = vmul.f32 %v317, %v349
      %v457 = vmul.f32 %v318, %v353
      %v458 = vmul.f32 %v319, %v349
      %v459 = vmul.f32 %v320, %v353
      %v460 = vmul.f32 %v321, %v349
      %v461 = vmul.f32 %v322, %v353
      %v462 = vmul.f32 %v323, %v349
      %v463 = vmul.f32 %v324, %v353
      %v464 = vmul.f32 %v325, %v349
      %v465 = vmul.f32 %v326, %v353
      %v466 = vmul.f32 %v327, %v349
      %v467 = vmul.f32 %v328, %v353
      %v468 = vmul.f32 %v329, %v349
      %v469 = vmul.f32 %v330, %v353
      %v470 = vmul.f32 %v331, %v349
      %v471 = vmul.f32 %v332, %v353
      %v472 = vmul.f32 %v333, %v349
      %v473 = vmul.f32 %v334, %v353
      %v474 = vmul.f32 %v335, %v349
      %v475 = vmul.f32 %v336, %v353
      %v476 = vmul.f32 %v337, %v349
      %v477 = vmul.f32 %v338, %v353
      %v478 = vmul.f32 %v339, %v349
      %v479 = vmul.f32 %v340, %v353
      %v480 = vmul.f32 %v341, %v349
      %v481 = vmul.f32 %v342, %v353
      %v482 = vmul.f32 %v343, %v349
      %v483 = vmul.f32 %v344, %v353
      %484 = vst [vmem:[%s207] sm:$0xff] %v356
      %485 = vst [vmem:[%s207 + $0x8] sm:$0xff] %v357
      %486 = vst [vmem:[%s207 + $0x10] sm:$0xff] %v358
      %487 = vst [vmem:[%s207 + $0x18] sm:$0xff] %v359
      %488 = vst [vmem:[%s207 + $0x20] sm:$0xff] %v360
      %489 = vst [vmem:[%s207 + $0x28] sm:$0xff] %v361
      %490 = vst [vmem:[%s207 + $0x30] sm:$0xff] %v362
      %491 = vst [vmem:[%s207 + $0x38] sm:$0xff] %v363
      %492 = vst [vmem:[%s207 + $0x40] sm:$0xff] %v364
      %493 = vst [vmem:[%s207 + $0x48] sm:$0xff] %v365
      %494 = vst [vmem:[%s207 + $0x50] sm:$0xff] %v366
      %495 = vst [vmem:[%s207 + $0x58] sm:$0xff] %v367
      %496 = vst [vmem:[%s207 + $0x60] sm:$0xff] %v368
      %497 = vst [vmem:[%s207 + $0x68] sm:$0xff] %v369
      %498 = vst [vmem:[%s207 + $0x70] sm:$0xff] %v370
      %499 = vst [vmem:[%s207 + $0x78] sm:$0xff] %v371
      %500 = vst [vmem:[%s207 + $0x80] sm:$0xff] %v372
      %501 = vst [vmem:[%s207 + $0x88] sm:$0xff] %v373
      %502 = vst [vmem:[%s207 + $0x90] sm:$0xff] %v374
      %503 = vst [vmem:[%s207 + $0x98] sm:$0xff] %v375
      %504 = vst [vmem:[%s207 + $0xa0] sm:$0xff] %v376
      %505 = vst [vmem:[%s207 + $0xa8] sm:$0xff] %v377
      %506 = vst [vmem:[%s207 + $0xb0] sm:$0xff] %v378
      %507 = vst [vmem:[%s207 + $0xb8] sm:$0xff] %v379
      %508 = vst [vmem:[%s207 + $0xc0] sm:$0xff] %v380
      %509 = vst [vmem:[%s207 + $0xc8] sm:$0xff] %v381
      %510 = vst [vmem:[%s207 + $0xd0] sm:$0xff] %v382
      %511 = vst [vmem:[%s207 + $0xd8] sm:$0xff] %v383
      %512 = vst [vmem:[%s207 + $0xe0] sm:$0xff] %v384
      %513 = vst [vmem:[%s207 + $0xe8] sm:$0xff] %v385
      %514 = vst [vmem:[%s207 + $0xf0] sm:$0xff] %v386
      %515 = vst [vmem:[%s207 + $0xf8] sm:$0xff] %v387
      %516 = vst [vmem:[%s207 + $0x100] sm:$0xff] %v388
      %517 = vst [vmem:[%s207 + $0x108] sm:$0xff] %v389
      %518 = vst [vmem:[%s207 + $0x110] sm:$0xff] %v390
      %519 = vst [vmem:[%s207 + $0x118] sm:$0xff] %v391
      %520 = vst [vmem:[%s207 + $0x120] sm:$0xff] %v392
      %521 = vst [vmem:[%s207 + $0x128] sm:$0xff] %v393
      %522 = vst [vmem:[%s207 + $0x130] sm:$0xff] %v394
      %523 = vst [vmem:[%s207 + $0x138] sm:$0xff] %v395
      %524 = vst [vmem:[%s207 + $0x140] sm:$0xff] %v396
      %525 = vst [vmem:[%s207 + $0x148] sm:$0xff] %v397
      %526 = vst [vmem:[%s207 + $0x150] sm:$0xff] %v398
      %527 = vst [vmem:[%s207 + $0x158] sm:$0xff] %v399
      %528 = vst [vmem:[%s207 + $0x160] sm:$0xff] %v400
      %529 = vst [vmem:[%s207 + $0x168] sm:$0xff] %v401
      %530 = vst [vmem:[%s207 + $0x170] sm:$0xff] %v402
      %531 = vst [vmem:[%s207 + $0x178] sm:$0xff] %v403
      %532 = vst [vmem:[%s207 + $0x180] sm:$0xff] %v404
      %533 = vst [vmem:[%s207 + $0x188] sm:$0xff] %v405
      %534 = vst [vmem:[%s207 + $0x190] sm:$0xff] %v406
      %535 = vst [vmem:[%s207 + $0x198] sm:$0xff] %v407
      %536 = vst [vmem:[%s207 + $0x1a0] sm:$0xff] %v408
      %537 = vst [vmem:[%s207 + $0x1a8] sm:$0xff] %v409
      %538 = vst [vmem:[%s207 + $0x1b0] sm:$0xff] %v410
      %539 = vst [vmem:[%s207 + $0x1b8] sm:$0xff] %v411
      %540 = vst [vmem:[%s207 + $0x1c0] sm:$0xff] %v412
      %541 = vst [vmem:[%s207 + $0x1c8] sm:$0xff] %v413
      %542 = vst [vmem:[%s207 + $0x1d0] sm:$0xff] %v414
      %543 = vst [vmem:[%s207 + $0x1d8] sm:$0xff] %v415
      %544 = vst [vmem:[%s207 + $0x1e0] sm:$0xff] %v416
      %545 = vst [vmem:[%s207 + $0x1e8] sm:$0xff] %v417
      %546 = vst [vmem:[%s207 + $0x1f0] sm:$0xff] %v418
      %547 = vst [vmem:[%s207 + $0x1f8] sm:$0xff] %v419
      %548 = vst [vmem:[%s207 + $0x200] sm:$0xff] %v420
      %549 = vst [vmem:[%s207 + $0x208] sm:$0xff] %v421
      %550 = vst [vmem:[%s207 + $0x210] sm:$0xff] %v422
      %551 = vst [vmem:[%s207 + $0x218] sm:$0xff] %v423
      %552 = vst [vmem:[%s207 + $0x220] sm:$0xff] %v424
      %553 = vst [vmem:[%s207 + $0x228] sm:$0xff] %v425
      %554 = vst [vmem:[%s207 + $0x230] sm:$0xff] %v426
      %555 = vst [vmem:[%s207 + $0x238] sm:$0xff] %v427
      %556 = vst [vmem:[%s207 + $0x240] sm:$0xff] %v428
      %557 = vst [vmem:[%s207 + $0x248] sm:$0xff] %v429
      %558 = vst [vmem:[%s207 + $0x250] sm:$0xff] %v430
      %559 = vst [vmem:[%s207 + $0x258] sm:$0xff] %v431
      %560 = vst [vmem:[%s207 + $0x260] sm:$0xff] %v432
      %561 = vst [vmem:[%s207 + $0x268] sm:$0xff] %v433
      %562 = vst [vmem:[%s207 + $0x270] sm:$0xff] %v434
      %563 = vst [vmem:[%s207 + $0x278] sm:$0xff] %v435
      %564 = vst [vmem:[%s207 + $0x280] sm:$0xff] %v436
      %565 = vst [vmem:[%s207 + $0x288] sm:$0xff] %v437
      %566 = vst [vmem:[%s207 + $0x290] sm:$0xff] %v438
      %567 = vst [vmem:[%s207 + $0x298] sm:$0xff] %v439
      %568 = vst [vmem:[%s207 + $0x2a0] sm:$0xff] %v440
      %569 = vst [vmem:[%s207 + $0x2a8] sm:$0xff] %v441
      %570 = vst [vmem:[%s207 + $0x2b0] sm:$0xff] %v442
      %571 = vst [vmem:[%s207 + $0x2b8] sm:$0xff] %v443
      %572 = vst [vmem:[%s207 + $0x2c0] sm:$0xff] %v444
      %573 = vst [vmem:[%s207 + $0x2c8] sm:$0xff] %v445
      %574 = vst [vmem:[%s207 + $0x2d0] sm:$0xff] %v446
      %575 = vst [vmem:[%s207 + $0x2d8] sm:$0xff] %v447
      %576 = vst [vmem:[%s207 + $0x2e0] sm:$0xff] %v448
      %577 = vst [vmem:[%s207 + $0x2e8] sm:$0xff] %v449
      %578 = vst [vmem:[%s207 + $0x2f0] sm:$0xff] %v450
      %579 = vst [vmem:[%s207 + $0x2f8] sm:$0xff] %v451
      %580 = vst [vmem:[%s207 + $0x300] sm:$0xff] %v452
      %581 = vst [vmem:[%s207 + $0x308] sm:$0xff] %v453
      %582 = vst [vmem:[%s207 + $0x310] sm:$0xff] %v454
      %583 = vst [vmem:[%s207 + $0x318] sm:$0xff] %v455
      %584 = vst [vmem:[%s207 + $0x320] sm:$0xff] %v456
      %585 = vst [vmem:[%s207 + $0x328] sm:$0xff] %v457
      %586 = vst [vmem:[%s207 + $0x330] sm:$0xff] %v458
      %587 = vst [vmem:[%s207 + $0x338] sm:$0xff] %v459
      %588 = vst [vmem:[%s207 + $0x340] sm:$0xff] %v460
      %589 = vst [vmem:[%s207 + $0x348] sm:$0xff] %v461
      %590 = vst [vmem:[%s207 + $0x350] sm:$0xff] %v462
      %591 = vst [vmem:[%s207 + $0x358] sm:$0xff] %v463
      %592 = vst [vmem:[%s207 + $0x360] sm:$0xff] %v464
      %593 = vst [vmem:[%s207 + $0x368] sm:$0xff] %v465
      %594 = vst [vmem:[%s207 + $0x370] sm:$0xff] %v466
      %595 = vst [vmem:[%s207 + $0x378] sm:$0xff] %v467
      %596 = vst [vmem:[%s207 + $0x380] sm:$0xff] %v468
      %597 = vst [vmem:[%s207 + $0x388] sm:$0xff] %v469
      %598 = vst [vmem:[%s207 + $0x390] sm:$0xff] %v470
      %599 = vst [vmem:[%s207 + $0x398] sm:$0xff] %v471
      %600 = vst [vmem:[%s207 + $0x3a0] sm:$0xff] %v472
      %601 = vst [vmem:[%s207 + $0x3a8] sm:$0xff] %v473
      %602 = vst [vmem:[%s207 + $0x3b0] sm:$0xff] %v474
      %603 = vst [vmem:[%s207 + $0x3b8] sm:$0xff] %v475
      %604 = vst [vmem:[%s207 + $0x3c0] sm:$0xff] %v476
      %605 = vst [vmem:[%s207 + $0x3c8] sm:$0xff] %v477
      %606 = vst [vmem:[%s207 + $0x3d0] sm:$0xff] %v478
      %607 = vst [vmem:[%s207 + $0x3d8] sm:$0xff] %v479
      %608 = vst [vmem:[%s207 + $0x3e0] sm:$0xff] %v480
      %609 = vst [vmem:[%s207 + $0x3e8] sm:$0xff] %v481
      %610 = vst [vmem:[%s207 + $0x3f0] sm:$0xff] %v482
      %611 = vst [vmem:[%s207 + $0x3f8] sm:$0xff] %v483
      %s612 = smul.u32 64, %s17
      %s613 = smul.u32 2, %s18
      %p614 = scmp.lt.s32.totalorder %s612, 127
      %s615 = scalar_select %p614, %s612, 127
      %p616 = scmp.lt.s32.totalorder %s613, 1
      %s617 = scalar_select %p616, %s613, 1
      %s618 = smul.addr %s615, 2
      %s619 = sadd.s32 %s617, %s618
      %s620 = smul.addr %s619, 8
      %s621 = scalar_lea.vmem %s2, %s620
      // Predicated region
      $region29: #{kernel_prior_forward_diag.1} parent=27 // pred_check
        %p622 = pneg %p99
      $region30: #{kernel_prior_forward_diag.1} parent=27 // pred_check_branch
        %624 = sbr.rel (%p622) target = $region32
      $region31: #{kernel_prior_forward_diag.1} parent=27 // pred_region
        %s625 = smul.u32 64, %s17
        %s626 = smul.u32 2, %s18
      $region32: #{kernel_prior_forward_diag.1} parent=27 // pred_fallthru
        _
    $region28: #{kernel_prior_forward_diag.1} parent=5 // pred_fallthru
      _
    %p627 = scmp.le.s32.totalorder 2, %s8
    // Predicated region
    $region33: #{kernel_prior_forward_diag.1} parent=5 // pred_check
      %p628 = pneg %p627
    $region34: #{kernel_prior_forward_diag.1} parent=5 // pred_check_branch
      %630 = sbr.rel (%p628) target = $region36
    $region35: #{kernel_prior_forward_diag.1} parent=5 // pred_region
      %s631 = ssub.s32 %s8, 2
      // Predicated region
      $region37: #{kernel_prior_forward_diag.1} parent=35 // pred_check
        %p632 = pneg %p105
      $region38: #{kernel_prior_forward_diag.1} parent=35 // pred_check_branch
        %634 = sbr.rel (%p632) target = $region40
      $region39: #{kernel_prior_forward_diag.1} parent=35 // pred_region
        %s635 = smul.u32 64, %s19
        %s636 = smul.u32 2, %s20
        %p637 = scmp.lt.s32.totalorder %s635, 127
        %s638 = scalar_select %p637, %s635, 127
        %p639 = scmp.lt.s32.totalorder %s636, 1
        %s640 = scalar_select %p639, %s636, 1
        %s641 = smul.addr %s638, 2
        %s642 = sadd.s32 %s640, %s641
        %s643 = smul.addr %s642, 8
        %s644 = scalar_lea.vmem %s2, %s643
      $region40: #{kernel_prior_forward_diag.1} parent=35 // pred_fallthru
        _
    $region36: #{kernel_prior_forward_diag.1} parent=5 // pred_fallthru
      _
  $region6: #{kernel_prior_forward_diag.1} parent=0 // loop_footer
    %s12 = sadd.s32 1, %s8
  $region7: #{kernel_prior_forward_diag.1} parent=0 // loop_footer_branch
    %7 = sbr.rel target = $region3
  $region8: #{kernel_prior_forward_diag.1} parent=0 // loop_exit
    _

</llo_original>
